<compile_context>
chip_gen: v5e
topology: v5e:2x2
jax: 0.10.0
libtpu: 0.0.40
codegen_flags: <defaults>
</compile_context>

<pallas_src>
import functools

import jax
import jax.numpy as jnp
from jax.experimental import pallas as pl
from jax.experimental.pallas import tpu as pltpu


def _round_up(x, m):
    return (x + m - 1) // m * m


def _lstm_enc_kernel(*refs, num_layers, seq_len, b_pad, hg):
    """Fused multi-layer LSTM over the full sequence (single invocation).

    refs layout:
      x_ref                  : (S*Bp, D)    input slab (compute dtype)
      [wi_l, wh_l, b_l] * L  : (Din_l,4HG), (HG,4HG), (1,4HG)
      y_ref                  : (S*Bp, HG)   last-layer hidden outputs (f32)
      hn_ref, cn_ref         : (L, Bp, HG)  final h / c per layer (f32)
      gx_sc                  : (S*Bp, 4HG)  scratch: hoisted input-projection gates
      act_sc                 : (S*Bp, HG)   scratch: inter-layer activations
    """
    x_ref = refs[0]
    w_refs = refs[1:1 + 3 * num_layers]
    y_ref, hn_ref, cn_ref = refs[1 + 3 * num_layers:4 + 3 * num_layers]
    gx_sc, act_sc = refs[4 + 3 * num_layers:]

    layer_in = x_ref
    for l in range(num_layers):
        wi_ref = w_refs[3 * l + 0]
        wh_ref = w_refs[3 * l + 1]
        b_ref = w_refs[3 * l + 2]

        # ---- hoisted input projection: one big matmul over all timesteps ----
        # bias is folded in here (added once, not per step).
        inp = layer_in[...].astype(wi_ref.dtype)
        gx_sc[...] = (
            jnp.dot(inp, wi_ref[...], preferred_element_type=jnp.float32)
            + b_ref[...])

        # Last layer writes straight to the lane-dense output slab; middle
        # layers write the VMEM activation slab consumed by the next layer.
        out_ref = y_ref if l == num_layers - 1 else act_sc

        # ---- serial recurrence: only h @ W_hh + elementwise cell update ----
        def step(t, carry):
            h, c = carry
            row = pl.multiple_of(t * b_pad, b_pad)
            gates = gx_sc[pl.ds(row, b_pad), :] + jnp.dot(
                h.astype(wh_ref.dtype), wh_ref[...],
                preferred_element_type=jnp.float32)
            # PyTorch gate order i, f, g, o; each block is HG (128-mult) wide.
            i_g = jax.nn.sigmoid(gates[:, 0 * hg:1 * hg])
            f_g = jax.nn.sigmoid(gates[:, 1 * hg:2 * hg])
            g_g = jnp.tanh(gates[:, 2 * hg:3 * hg])
            o_g = jax.nn.sigmoid(gates[:, 3 * hg:4 * hg])
            c_new = f_g * c + i_g * g_g
            h_new = o_g * jnp.tanh(c_new)
            out_ref[pl.ds(row, b_pad), :] = h_new   # full-width, lane-dense store
            return h_new, c_new

        h0 = jnp.zeros((b_pad, hg), jnp.float32)
        c0 = jnp.zeros((b_pad, hg), jnp.float32)
        h_f, c_f = jax.lax.fori_loop(0, seq_len, step, (h0, c0))

        hn_ref[l] = h_f
        cn_ref[l] = c_f
        layer_in = out_ref


def _pad_gate_cols(w, h, hg):
    """(rows, 4*h) -> (rows, 4*hg): zero-pad each gate column block to hg lanes."""
    if hg == h:
        return w
    rows = w.shape[0]
    w4 = w.reshape(rows, 4, h)
    w4 = jnp.pad(w4, ((0, 0), (0, 0), (0, hg - h)))
    return w4.reshape(rows, 4 * hg)


def lstm_enc_forward(x, params, num_layers, hidden_dim,
                     compute_dtype=jnp.float32):
    """Equivalent of LSTM_enc.forward(x) with hidden = init_hidden() (zeros).

    x: (seq_len, batch, input_dim), PyTorch nn.LSTM default (batch_first=False).
    Returns (lstm_out, (h_n, c_n)) in f32 with PyTorch shapes.
    """
    seq_len, batch, input_dim = x.shape
    H = hidden_dim
    HG = _round_up(H, 128)      # lane-aligned per-gate width
    BP = _round_up(batch, 8)    # sublane-aligned batch

    # Pad batch and flatten (S, Bp, D) -> (S*Bp, D): the input projection
    # becomes one big matmul and per-step rows are aligned sublane slices.
    x_p = jnp.pad(x, ((0, 0), (0, BP - batch), (0, 0)))
    x_flat = x_p.reshape(seq_len * BP, input_dim).astype(compute_dtype)

    weight_args = []
    in_specs = [pl.BlockSpec(memory_space=pltpu.MemorySpace.VMEM)]
    for l in range(num_layers):
        w_ih, w_hh, b_ih, b_hh = params[l]
        wi_t = jnp.transpose(w_ih)                                 # (Din, 4H)
        if l > 0:
            # inputs of layers > 0 are the HG-padded activations
            wi_t = jnp.pad(wi_t, ((0, HG - H), (0, 0)))
        wh_t = jnp.pad(jnp.transpose(w_hh), ((0, HG - H), (0, 0)))  # (HG, 4H)
        wi = _pad_gate_cols(wi_t, H, HG).astype(compute_dtype)
        wh = _pad_gate_cols(wh_t, H, HG).astype(compute_dtype)
        bias = _pad_gate_cols((b_ih + b_hh).reshape(1, 4 * H), H, HG)
        weight_args += [wi, wh, bias.astype(jnp.float32)]
        in_specs += [pl.BlockSpec(memory_space=pltpu.MemorySpace.VMEM)] * 3

    kernel = functools.partial(
        _lstm_enc_kernel, num_layers=num_layers, seq_len=seq_len,
        b_pad=BP, hg=HG)

    y_flat, hn_p, cn_p = pl.pallas_call(
        kernel,
        out_shape=(
            jax.ShapeDtypeStruct((seq_len * BP, HG), jnp.float32),
            jax.ShapeDtypeStruct((num_layers, BP, HG), jnp.float32),
            jax.ShapeDtypeStruct((num_layers, BP, HG), jnp.float32),
        ),
        in_specs=in_specs,
        out_specs=(
            pl.BlockSpec(memory_space=pltpu.MemorySpace.VMEM),
            pl.BlockSpec(memory_space=pltpu.MemorySpace.VMEM),
            pl.BlockSpec(memory_space=pltpu.MemorySpace.VMEM),
        ),
        scratch_shapes=[
            pltpu.VMEM((seq_len * BP, 4 * HG), jnp.float32),  # hoisted gates
            pltpu.VMEM((seq_len * BP, HG), jnp.float32),      # inter-layer acts
        ],
        compiler_params=pltpu.CompilerParams(
            vmem_limit_bytes=32 * 1024 * 1024),
    )(x_flat, *weight_args)

    lstm_out = y_flat.reshape(seq_len, BP, HG)[:, :batch, :H]
    h_n = hn_p[:, :batch, :H]
    c_n = cn_p[:, :batch, :H]
    return lstm_out, (h_n, c_n)


def init_lstm_params(key, input_dim, hidden_dim, num_layers):
    """Deterministic init matching PyTorch nn.LSTM parameter shapes."""
    k = 1.0 / jnp.sqrt(jnp.float32(hidden_dim))
    params = []
    for l in range(num_layers):
        in_dim = input_dim if l == 0 else hidden_dim
        key, k1, k2, k3, k4 = jax.random.split(key, 5)
        w_ih = jax.random.uniform(k1, (4 * hidden_dim, in_dim), jnp.float32, -k, k)
        w_hh = jax.random.uniform(k2, (4 * hidden_dim, hidden_dim), jnp.float32, -k, k)
        b_ih = jax.random.uniform(k3, (4 * hidden_dim,), jnp.float32, -k, k)
        b_hh = jax.random.uniform(k4, (4 * hidden_dim,), jnp.float32, -k, k)
        params.append((w_ih, w_hh, b_ih, b_hh))
    return params


def lstm_enc_reference(x, params, num_layers, hidden_dim):
    """Pure-JAX reference for correctness checking."""
    seq_len, batch, _ = x.shape
    layer_in = x
    h_all, c_all = [], []
    for l in range(num_layers):
        w_ih, w_hh, b_ih, b_hh = params[l]
        h = jnp.zeros((batch, hidden_dim), jnp.float32)
        c = jnp.zeros((batch, hidden_dim), jnp.float32)
        outs = []
        for t in range(seq_len):
            gates = layer_in[t] @ w_ih.T + h @ w_hh.T + b_ih + b_hh
            i = jax.nn.sigmoid(gates[:, 0 * hidden_dim:1 * hidden_dim])
            f = jax.nn.sigmoid(gates[:, 1 * hidden_dim:2 * hidden_dim])
            g = jnp.tanh(gates[:, 2 * hidden_dim:3 * hidden_dim])
            o = jax.nn.sigmoid(gates[:, 3 * hidden_dim:4 * hidden_dim])
            c = f * c + i * g
            h = o * jnp.tanh(c)
            outs.append(h)
        layer_in = jnp.stack(outs, axis=0)
        h_all.append(h)
        c_all.append(c)
    return layer_in, (jnp.stack(h_all, 0), jnp.stack(c_all, 0))


if __name__ == "__main__":
    # Small shapes consistent with the module's forward.
    input_dim = 16
    hidden_dim = 32
    num_layers = 2
    batch_size = 4
    seq_len = 8

    key = jax.random.PRNGKey(0)
    key, xk = jax.random.split(key)
    x = jax.random.normal(xk, (seq_len, batch_size, input_dim), jnp.float32)
    params = init_lstm_params(key, input_dim, hidden_dim, num_layers)

    fwd = jax.jit(lstm_enc_forward, static_argnums=(2, 3, 4))

    # f32 matmul path: tight check against pure-JAX reference.
    lstm_out, (h_n, c_n) = fwd(x, params, num_layers, hidden_dim, jnp.float32)
    jax.block_until_ready((lstm_out, h_n, c_n))

    ref_out, (ref_h, ref_c) = lstm_enc_reference(x, params, num_layers, hidden_dim)
    assert lstm_out.shape == (seq_len, batch_size, hidden_dim)
    assert h_n.shape == (num_layers, batch_size, hidden_dim)
    assert c_n.shape == (num_layers, batch_size, hidden_dim)
    assert jnp.allclose(lstm_out, ref_out, atol=1e-4, rtol=1e-4)
    assert jnp.allclose(h_n, ref_h, atol=1e-4, rtol=1e-4)
    assert jnp.allclose(c_n, ref_c, atol=1e-4, rtol=1e-4)

    # bf16 matmul operands (MXU-native production mode), f32 state/accumulation.
    out_bf, (h_bf, c_bf) = fwd(x, params, num_layers, hidden_dim, jnp.bfloat16)
    jax.block_until_ready((out_bf, h_bf, c_bf))
    assert jnp.allclose(out_bf, ref_out, atol=1e-1, rtol=1e-1)
    assert jnp.allclose(h_bf, ref_h, atol=1e-1, rtol=1e-1)

    print("KERNEL_OK")
</pallas_src>

<mosaic_0001>
module attributes {stable_mosaic.version = 11 : i64} {
  func.func @_lstm_enc_kernel(%arg0: memref<64x16xf32, #tpu.memory_space<vmem>>, %arg1: memref<16x512xf32, #tpu.memory_space<vmem>>, %arg2: memref<128x512xf32, #tpu.memory_space<vmem>>, %arg3: memref<1x512xf32, #tpu.memory_space<vmem>>, %arg4: memref<128x512xf32, #tpu.memory_space<vmem>>, %arg5: memref<128x512xf32, #tpu.memory_space<vmem>>, %arg6: memref<1x512xf32, #tpu.memory_space<vmem>>, %arg7: memref<64x128xf32, #tpu.memory_space<vmem>>, %arg8: memref<2x8x128xf32, #tpu.memory_space<vmem>>, %arg9: memref<2x8x128xf32, #tpu.memory_space<vmem>>, %arg10: memref<64x512xf32, #tpu.memory_space<vmem>>, %arg11: memref<64x128xf32, #tpu.memory_space<vmem>>) attributes {dimension_semantics = [], scalar_prefetch = 0 : i64, scratch_operands = 2 : i64, tpu.core_type = #tpu.core_type<tc>} {
    %c0 = arith.constant 0 : index
    %c0_0 = arith.constant 0 : index
    %0 = vector.load %arg0[%c0, %c0_0] : memref<64x16xf32, #tpu.memory_space<vmem>>, vector<64x16xf32>
    %c0_1 = arith.constant 0 : index
    %c0_2 = arith.constant 0 : index
    %1 = vector.load %arg1[%c0_1, %c0_2] : memref<16x512xf32, #tpu.memory_space<vmem>>, vector<16x512xf32>
    %cst = arith.constant dense<0.000000e+00> : vector<64x512xf32>
    %2 = tpu.matmul %0, %1, %cst {dimension_numbers = #tpu.dot_dimension_numbers<[1], [0], [0], [1], [0, 0, 1, 1], [], []>} : vector<64x16xf32>, vector<16x512xf32>, vector<64x512xf32> -> vector<64x512xf32>
    %c0_3 = arith.constant 0 : index
    %c0_4 = arith.constant 0 : index
    %3 = vector.load %arg3[%c0_3, %c0_4] : memref<1x512xf32, #tpu.memory_space<vmem>>, vector<1x512xf32>
    %4 = vector.broadcast %3 : vector<1x512xf32> to vector<64x512xf32>
    %5 = arith.addf %2, %4 : vector<64x512xf32>
    %c0_5 = arith.constant 0 : index
    %c0_6 = arith.constant 0 : index
    %6 = vector.load %arg10[%c0_5, %c0_6] : memref<64x512xf32, #tpu.memory_space<vmem>>, vector<64x512xf32>
    tpu.vector_store %arg10[%c0_5, %c0_6], %5 {strides = array<i32>} : memref<64x512xf32, #tpu.memory_space<vmem>>, vector<64x512xf32>,
    %cst_7 = arith.constant 0.000000e+00 : f32
    %7 = vector.broadcast %cst_7 : f32 to vector<8x128xf32>
    %cst_8 = arith.constant 0.000000e+00 : f32
    %8 = vector.broadcast %cst_8 : f32 to vector<8x128xf32>
    %c0_i32 = arith.constant 0 : i32
    %c8_i32 = arith.constant 8 : i32
    %9 = arith.addi %c0_i32, %c8_i32 : i32
    %c1_i32 = arith.constant 1 : i32
    %10:2 = scf.for %arg12 = %c0_i32 to %9 step %c1_i32 iter_args(%arg13 = %7, %arg14 = %8) -> (vector<8x128xf32>, vector<8x128xf32>)  : i32 {
      %c8_i32_36 = arith.constant 8 : i32
      %34 = arith.muli %arg12, %c8_i32_36 : i32
      %35 = tpu.assume_multiple %34, 8 : i32
      %36 = arith.index_cast %35 : i32 to index
      %c0_37 = arith.constant 0 : index
      %37 = vector.load %arg10[%36, %c0_37] : memref<64x512xf32, #tpu.memory_space<vmem>>, vector<8x512xf32>
      %c0_38 = arith.constant 0 : index
      %c0_39 = arith.constant 0 : index
      %38 = vector.load %arg2[%c0_38, %c0_39] : memref<128x512xf32, #tpu.memory_space<vmem>>, vector<128x512xf32>
      %cst_40 = arith.constant dense<0.000000e+00> : vector<8x512xf32>
      %39 = tpu.matmul %arg13, %38, %cst_40 {dimension_numbers = #tpu.dot_dimension_numbers<[1], [0], [0], [1], [0, 0, 1, 1], [], []>} : vector<8x128xf32>, vector<128x512xf32>, vector<8x512xf32> -> vector<8x512xf32>
      %40 = arith.addf %37, %39 : vector<8x512xf32>
      %41 = vector.extract_strided_slice %40 {offsets = [0, 0], sizes = [8, 128], strides = [1, 1]} : vector<8x512xf32> to vector<8x128xf32>
      %42 = arith.negf %41 : vector<8x128xf32>
      %43 = math.exp %42 : vector<8x128xf32>
      %cst_41 = arith.constant 1.000000e+00 : f32
      %44 = vector.broadcast %cst_41 : f32 to vector<8x128xf32>
      %45 = arith.addf %44, %43 : vector<8x128xf32>
      %46 = arith.divf %44, %45 : vector<8x128xf32>
      %47 = vector.extract_strided_slice %40 {offsets = [0, 128], sizes = [8, 128], strides = [1, 1]} : vector<8x512xf32> to vector<8x128xf32>
      %48 = arith.negf %47 : vector<8x128xf32>
      %49 = math.exp %48 : vector<8x128xf32>
      %cst_42 = arith.constant 1.000000e+00 : f32
      %50 = vector.broadcast %cst_42 : f32 to vector<8x128xf32>
      %51 = arith.addf %50, %49 : vector<8x128xf32>
      %52 = arith.divf %50, %51 : vector<8x128xf32>
      %53 = vector.extract_strided_slice %40 {offsets = [0, 256], sizes = [8, 128], strides = [1, 1]} : vector<8x512xf32> to vector<8x128xf32>
      %54 = math.tanh %53 : vector<8x128xf32>
      %55 = vector.extract_strided_slice %40 {offsets = [0, 384], sizes = [8, 128], strides = [1, 1]} : vector<8x512xf32> to vector<8x128xf32>
      %56 = arith.negf %55 : vector<8x128xf32>
      %57 = math.exp %56 : vector<8x128xf32>
      %cst_43 = arith.constant 1.000000e+00 : f32
      %58 = vector.broadcast %cst_43 : f32 to vector<8x128xf32>
      %59 = arith.addf %58, %57 : vector<8x128xf32>
      %60 = arith.divf %58, %59 : vector<8x128xf32>
      %61 = arith.mulf %52, %arg14 : vector<8x128xf32>
      %62 = arith.mulf %46, %54 : vector<8x128xf32>
      %63 = arith.addf %61, %62 : vector<8x128xf32>
      %64 = math.tanh %63 : vector<8x128xf32>
      %65 = arith.mulf %60, %64 : vector<8x128xf32>
      %66 = arith.index_cast %35 : i32 to index
      %c0_44 = arith.constant 0 : index
      %67 = vector.load %arg11[%66, %c0_44] : memref<64x128xf32, #tpu.memory_space<vmem>>, vector<8x128xf32>
      tpu.vector_store %arg11[%66, %c0_44], %65 {strides = array<i32>} : memref<64x128xf32, #tpu.memory_space<vmem>>, vector<8x128xf32>,
      scf.yield %65, %63 : vector<8x128xf32>, vector<8x128xf32>
    }
    %c8_i32_9 = arith.constant 8 : i32
    %c0_10 = arith.constant 0 : index
    %c0_11 = arith.constant 0 : index
    %c0_12 = arith.constant 0 : index
    %11 = vector.load %arg8[%c0_10, %c0_11, %c0_12] : memref<2x8x128xf32, #tpu.memory_space<vmem>>, vector<1x8x128xf32>
    %12 = vector.shape_cast %11 : vector<1x8x128xf32> to vector<8x128xf32>
    %13 = vector.shape_cast %10#0 : vector<8x128xf32> to vector<1x8x128xf32>
    tpu.vector_store %arg8[%c0_10, %c0_11, %c0_12], %13 {strides = array<i32>} : memref<2x8x128xf32, #tpu.memory_space<vmem>>, vector<1x8x128xf32>,
    %c0_13 = arith.constant 0 : index
    %c0_14 = arith.constant 0 : index
    %c0_15 = arith.constant 0 : index
    %14 = vector.load %arg9[%c0_13, %c0_14, %c0_15] : memref<2x8x128xf32, #tpu.memory_space<vmem>>, vector<1x8x128xf32>
    %15 = vector.shape_cast %14 : vector<1x8x128xf32> to vector<8x128xf32>
    %16 = vector.shape_cast %10#1 : vector<8x128xf32> to vector<1x8x128xf32>
    tpu.vector_store %arg9[%c0_13, %c0_14, %c0_15], %16 {strides = array<i32>} : memref<2x8x128xf32, #tpu.memory_space<vmem>>, vector<1x8x128xf32>,
    %c0_16 = arith.constant 0 : index
    %c0_17 = arith.constant 0 : index
    %17 = vector.load %arg11[%c0_16, %c0_17] : memref<64x128xf32, #tpu.memory_space<vmem>>, vector<64x128xf32>
    %c0_18 = arith.constant 0 : index
    %c0_19 = arith.constant 0 : index
    %18 = vector.load %arg4[%c0_18, %c0_19] : memref<128x512xf32, #tpu.memory_space<vmem>>, vector<128x512xf32>
    %cst_20 = arith.constant dense<0.000000e+00> : vector<64x512xf32>
    %19 = tpu.matmul %17, %18, %cst_20 {dimension_numbers = #tpu.dot_dimension_numbers<[1], [0], [0], [1], [0, 0, 1, 1], [], []>} : vector<64x128xf32>, vector<128x512xf32>, vector<64x512xf32> -> vector<64x512xf32>
    %c0_21 = arith.constant 0 : index
    %c0_22 = arith.constant 0 : index
    %20 = vector.load %arg6[%c0_21, %c0_22] : memref<1x512xf32, #tpu.memory_space<vmem>>, vector<1x512xf32>
    %21 = vector.broadcast %20 : vector<1x512xf32> to vector<64x512xf32>
    %22 = arith.addf %19, %21 : vector<64x512xf32>
    %c0_23 = arith.constant 0 : index
    %c0_24 = arith.constant 0 : index
    %23 = vector.load %arg10[%c0_23, %c0_24] : memref<64x512xf32, #tpu.memory_space<vmem>>, vector<64x512xf32>
    tpu.vector_store %arg10[%c0_23, %c0_24], %22 {strides = array<i32>} : memref<64x512xf32, #tpu.memory_space<vmem>>, vector<64x512xf32>,
    %cst_25 = arith.constant 0.000000e+00 : f32
    %24 = vector.broadcast %cst_25 : f32 to vector<8x128xf32>
    %cst_26 = arith.constant 0.000000e+00 : f32
    %25 = vector.broadcast %cst_26 : f32 to vector<8x128xf32>
    %c0_i32_27 = arith.constant 0 : i32
    %c8_i32_28 = arith.constant 8 : i32
    %26 = arith.addi %c0_i32_27, %c8_i32_28 : i32
    %c1_i32_29 = arith.constant 1 : i32
    %27:2 = scf.for %arg12 = %c0_i32_27 to %26 step %c1_i32_29 iter_args(%arg13 = %24, %arg14 = %25) -> (vector<8x128xf32>, vector<8x128xf32>)  : i32 {
      %c8_i32_36 = arith.constant 8 : i32
      %34 = arith.muli %arg12, %c8_i32_36 : i32
      %35 = tpu.assume_multiple %34, 8 : i32
      %36 = arith.index_cast %35 : i32 to index
      %c0_37 = arith.constant 0 : index
      %37 = vector.load %arg10[%36, %c0_37] : memref<64x512xf32, #tpu.memory_space<vmem>>, vector<8x512xf32>
      %c0_38 = arith.constant 0 : index
      %c0_39 = arith.constant 0 : index
      %38 = vector.load %arg5[%c0_38, %c0_39] : memref<128x512xf32, #tpu.memory_space<vmem>>, vector<128x512xf32>
      %cst_40 = arith.constant dense<0.000000e+00> : vector<8x512xf32>
      %39 = tpu.matmul %arg13, %38, %cst_40 {dimension_numbers = #tpu.dot_dimension_numbers<[1], [0], [0], [1], [0, 0, 1, 1], [], []>} : vector<8x128xf32>, vector<128x512xf32>, vector<8x512xf32> -> vector<8x512xf32>
      %40 = arith.addf %37, %39 : vector<8x512xf32>
      %41 = vector.extract_strided_slice %40 {offsets = [0, 0], sizes = [8, 128], strides = [1, 1]} : vector<8x512xf32> to vector<8x128xf32>
      %42 = arith.negf %41 : vector<8x128xf32>
      %43 = math.exp %42 : vector<8x128xf32>
      %cst_41 = arith.constant 1.000000e+00 : f32
      %44 = vector.broadcast %cst_41 : f32 to vector<8x128xf32>
      %45 = arith.addf %44, %43 : vector<8x128xf32>
      %46 = arith.divf %44, %45 : vector<8x128xf32>
      %47 = vector.extract_strided_slice %40 {offsets = [0, 128], sizes = [8, 128], strides = [1, 1]} : vector<8x512xf32> to vector<8x128xf32>
      %48 = arith.negf %47 : vector<8x128xf32>
      %49 = math.exp %48 : vector<8x128xf32>
      %cst_42 = arith.constant 1.000000e+00 : f32
      %50 = vector.broadcast %cst_42 : f32 to vector<8x128xf32>
      %51 = arith.addf %50, %49 : vector<8x128xf32>
      %52 = arith.divf %50, %51 : vector<8x128xf32>
      %53 = vector.extract_strided_slice %40 {offsets = [0, 256], sizes = [8, 128], strides = [1, 1]} : vector<8x512xf32> to vector<8x128xf32>
      %54 = math.tanh %53 : vector<8x128xf32>
      %55 = vector.extract_strided_slice %40 {offsets = [0, 384], sizes = [8, 128], strides = [1, 1]} : vector<8x512xf32> to vector<8x128xf32>
      %56 = arith.negf %55 : vector<8x128xf32>
      %57 = math.exp %56 : vector<8x128xf32>
      %cst_43 = arith.constant 1.000000e+00 : f32
      %58 = vector.broadcast %cst_43 : f32 to vector<8x128xf32>
      %59 = arith.addf %58, %57 : vector<8x128xf32>
      %60 = arith.divf %58, %59 : vector<8x128xf32>
      %61 = arith.mulf %52, %arg14 : vector<8x128xf32>
      %62 = arith.mulf %46, %54 : vector<8x128xf32>
      %63 = arith.addf %61, %62 : vector<8x128xf32>
      %64 = math.tanh %63 : vector<8x128xf32>
      %65 = arith.mulf %60, %64 : vector<8x128xf32>
      %66 = arith.index_cast %35 : i32 to index
      %c0_44 = arith.constant 0 : index
      %67 = vector.load %arg7[%66, %c0_44] : memref<64x128xf32, #tpu.memory_space<vmem>>, vector<8x128xf32>
      tpu.vector_store %arg7[%66, %c0_44], %65 {strides = array<i32>} : memref<64x128xf32, #tpu.memory_space<vmem>>, vector<8x128xf32>,
      scf.yield %65, %63 : vector<8x128xf32>, vector<8x128xf32>
    }
    %c8_i32_30 = arith.constant 8 : i32
    %c1 = arith.constant 1 : index
    %c0_31 = arith.constant 0 : index
    %c0_32 = arith.constant 0 : index
    %28 = vector.load %arg8[%c1, %c0_31, %c0_32] : memref<2x8x128xf32, #tpu.memory_space<vmem>>, vector<1x8x128xf32>
    %29 = vector.shape_cast %28 : vector<1x8x128xf32> to vector<8x128xf32>
    %30 = vector.shape_cast %27#0 : vector<8x128xf32> to vector<1x8x128xf32>
    tpu.vector_store %arg8[%c1, %c0_31, %c0_32], %30 {strides = array<i32>} : memref<2x8x128xf32, #tpu.memory_space<vmem>>, vector<1x8x128xf32>,
    %c1_33 = arith.constant 1 : index
    %c0_34 = arith.constant 0 : index
    %c0_35 = arith.constant 0 : index
    %31 = vector.load %arg9[%c1_33, %c0_34, %c0_35] : memref<2x8x128xf32, #tpu.memory_space<vmem>>, vector<1x8x128xf32>
    %32 = vector.shape_cast %31 : vector<1x8x128xf32> to vector<8x128xf32>
    %33 = vector.shape_cast %27#1 : vector<8x128xf32> to vector<1x8x128xf32>
    tpu.vector_store %arg9[%c1_33, %c0_34, %c0_35], %33 {strides = array<i32>} : memref<2x8x128xf32, #tpu.memory_space<vmem>>, vector<1x8x128xf32>,
    return
  }
}

</mosaic_0001>

<llo_original>
// kernel: lstm_enc_forward.1
$region0: #{lstm_enc_forward.1}
  #allocation0 [shape = 'u32[]', space=smem, size = 0x4, offset = 0x4, fixed_abs, tag = 'smem constant byte address 0x4 - core index']
  #allocation1 [shape = 'u32[72,128]{1,0:T(1,128)}', space=vmem, size = 0x9000, scoped, tag = 'internal scratch']
  #allocation2 [shape = 'f32[64,512]{1,0:T(8,128)}', space=vmem, size = 0x20000, scoped, tag = 'scratch operand']
  #allocation3 [shape = 'f32[64,128]{1,0:T(8,128)}', space=vmem, size = 0x8000, scoped, tag = 'scratch operand']
  %s0 = inlined_call_operand.vmem [shape: f32[64,16], index: 0, kind: input, shape index: {}]
  %s1 = inlined_call_operand.vmem [shape: f32[16,512], index: 1, kind: input, shape index: {}]
  %s2 = inlined_call_operand.vmem [shape: f32[128,512], index: 2, kind: input, shape index: {}]
  %s3 = inlined_call_operand.vmem [shape: f32[1,512], index: 3, kind: input, shape index: {}]
  %s4 = inlined_call_operand.vmem [shape: f32[128,512], index: 4, kind: input, shape index: {}]
  %s5 = inlined_call_operand.vmem [shape: f32[128,512], index: 5, kind: input, shape index: {}]
  %s6 = inlined_call_operand.vmem [shape: f32[1,512], index: 6, kind: input, shape index: {}]
  %s7 = inlined_call_operand.vmem [shape: f32[64,128], index: 7, kind: output, shape index: {0}]
  %s8 = inlined_call_operand.vmem [shape: f32[2,8,128], index: 8, kind: output, shape index: {1}]
  %s9 = inlined_call_operand.vmem [shape: f32[2,8,128], index: 9, kind: output, shape index: {2}]
  %10 = xla_tuple %s7, %s8, %s9
  %s11 = sld [smem:[#allocation0]]
  $region68: #{lstm_enc_forward.1} parent=0
    _
  %s13 = ssub.s32 1, %s11
  %s14 = scalar_select 0, %s13, %s11
  // Predicated region
  $region2: #{lstm_enc_forward.1} parent=0 // pred_check
    _
  $region3: #{lstm_enc_forward.1} parent=0 // pred_check_branch
    %16 = sbr.rel (0) target = $region5
  $region4: #{lstm_enc_forward.1} parent=0 // pred_region
    _
  $region5: #{lstm_enc_forward.1} parent=0 // pred_fallthru
    _
  // Predicated region
  $region6: #{lstm_enc_forward.1} parent=0 // pred_check
    _
  $region7: #{lstm_enc_forward.1} parent=0 // pred_check_branch
    %18 = sbr.rel (0) target = $region9
  $region8: #{lstm_enc_forward.1} parent=0 // pred_region
    _
  $region9: #{lstm_enc_forward.1} parent=0 // pred_fallthru
    _
  // Predicated region
  $region10: #{lstm_enc_forward.1} parent=0 // pred_check
    _
  $region11: #{lstm_enc_forward.1} parent=0 // pred_check_branch
    %20 = sbr.rel (0) target = $region13
  $region12: #{lstm_enc_forward.1} parent=0 // pred_region
    _
  $region13: #{lstm_enc_forward.1} parent=0 // pred_fallthru
    _
  // Predicated region
  $region14: #{lstm_enc_forward.1} parent=0 // pred_check
    _
  $region15: #{lstm_enc_forward.1} parent=0 // pred_check_branch
    %22 = sbr.rel (0) target = $region17
  $region16: #{lstm_enc_forward.1} parent=0 // pred_region
    _
  $region17: #{lstm_enc_forward.1} parent=0 // pred_fallthru
    _
  // Predicated region
  $region18: #{lstm_enc_forward.1} parent=0 // pred_check
    _
  $region19: #{lstm_enc_forward.1} parent=0 // pred_check_branch
    %24 = sbr.rel (0) target = $region21
  $region20: #{lstm_enc_forward.1} parent=0 // pred_region
    _
  $region21: #{lstm_enc_forward.1} parent=0 // pred_fallthru
    _
  // Predicated region
  $region22: #{lstm_enc_forward.1} parent=0 // pred_check
    _
  $region23: #{lstm_enc_forward.1} parent=0 // pred_check_branch
    %26 = sbr.rel (0) target = $region25
  $region24: #{lstm_enc_forward.1} parent=0 // pred_region
    _
  $region25: #{lstm_enc_forward.1} parent=0 // pred_fallthru
    _
  // Predicated region
  $region26: #{lstm_enc_forward.1} parent=0 // pred_check
    _
  $region27: #{lstm_enc_forward.1} parent=0 // pred_check_branch
    %28 = sbr.rel (0) target = $region29
  $region28: #{lstm_enc_forward.1} parent=0 // pred_region
    _
  $region29: #{lstm_enc_forward.1} parent=0 // pred_fallthru
    _
  %v29 = vld [vmem:[%s0] sm:$0xff]
  %v30 = vld [vmem:[%s0 + $0x8] sm:$0xff]
  %v31 = vld [vmem:[%s0 + $0x10] sm:$0xff]
  %v32 = vld [vmem:[%s0 + $0x18] sm:$0xff]
  %v33 = vld [vmem:[%s0 + $0x20] sm:$0xff]
  %v34 = vld [vmem:[%s0 + $0x28] sm:$0xff]
  %v35 = vld [vmem:[%s0 + $0x30] sm:$0xff]
  %v36 = vld [vmem:[%s0 + $0x38] sm:$0xff]
  %v37 = vld [vmem:[%s1] sm:$0xff]
  %v38 = vld [vmem:[%s1 + $0x8] sm:$0xff]
  %v39 = vld [vmem:[%s1 + $0x10] sm:$0xff]
  %v40 = vld [vmem:[%s1 + $0x18] sm:$0xff]
  %v41 = vld [vmem:[%s1 + $0x20] sm:$0xff]
  %v42 = vld [vmem:[%s1 + $0x28] sm:$0xff]
  %v43 = vld [vmem:[%s1 + $0x30] sm:$0xff]
  %v44 = vld [vmem:[%s1 + $0x38] sm:$0xff]
  %v45 = vld [vmem:[%s3] sm:$0xf]
  %v47 = vperm.slane %v45, 0
  %v48 = vperm.slane %v45, 1
  %v49 = vperm.slane %v45, 2
  %v50 = vperm.slane %v45, 3
  %vm55 = vcmask 130048
  %v57 = vsel %vm55, %v29, 0
  %v60 = vsel %vm55, %v30, 0
  %v63 = vsel %vm55, %v31, 0
  %v66 = vsel %vm55, %v32, 0
  %v69 = vsel %vm55, %v33, 0
  %v72 = vsel %vm55, %v34, 0
  %v75 = vsel %vm55, %v35, 0
  %v78 = vsel %vm55, %v36, 0
  %80 = vmatpush.msra.mxu0 0.0
  %81 = vmatpush.msra.mxu0 0.0
  %82 = vmatpush.msra.mxu0 0.0
  %83 = vmatpush.msra.mxu0 0.0
  %84 = vmatpush.msra.mxu0 0.0
  %85 = vmatpush.msra.mxu0 0.0
  %86 = vmatpush.msra.mxu0 0.0
  %87 = vmatpush.msra.mxu0 0.0
  %88 = vmatpush.msra.mxu0 0.0
  %89 = vmatpush.msra.mxu0 0.0
  %90 = vmatpush.msra.mxu0 0.0
  %91 = vmatpush.msra.mxu0 0.0
  %92 = vmatpush.msra.mxu0 0.0
  %93 = vmatpush.msra.mxu0 0.0
  %94 = vmatpush.msra.mxu0 %v41
  %95 = vmatpush.msra.mxu0 %v37
  %96 = vmatmul.f32.gmra.mxu0 %v57
  %v97 = vpop.f32.mrf.mxu0
  %v98 = vadd.f32 %v47, %v97
  %99 = vmatmul.f32.gmra.mxu0 %v60
  %v100 = vpop.f32.mrf.mxu0
  %v101 = vadd.f32 %v47, %v100
  %102 = vmatmul.f32.gmra.mxu0 %v63
  %v103 = vpop.f32.mrf.mxu0
  %v104 = vadd.f32 %v47, %v103
  %105 = vmatmul.f32.gmra.mxu0 %v66
  %v106 = vpop.f32.mrf.mxu0
  %v107 = vadd.f32 %v47, %v106
  %108 = vmatmul.f32.gmra.mxu0 %v69
  %v109 = vpop.f32.mrf.mxu0
  %v110 = vadd.f32 %v47, %v109
  %111 = vmatmul.f32.gmra.mxu0 %v72
  %v112 = vpop.f32.mrf.mxu0
  %v113 = vadd.f32 %v47, %v112
  %114 = vmatmul.f32.gmra.mxu0 %v75
  %v115 = vpop.f32.mrf.mxu0
  %v116 = vadd.f32 %v47, %v115
  %117 = vmatmul.f32.gmra.mxu0 %v78
  %v118 = vpop.f32.mrf.mxu0
  %v119 = vadd.f32 %v47, %v118
  %120 = vdwg.mxu0
  %121 = vmatpush.msra.mxu0 0.0
  %122 = vmatpush.msra.mxu0 0.0
  %123 = vmatpush.msra.mxu0 0.0
  %124 = vmatpush.msra.mxu0 0.0
  %125 = vmatpush.msra.mxu0 0.0
  %126 = vmatpush.msra.mxu0 0.0
  %127 = vmatpush.msra.mxu0 0.0
  %128 = vmatpush.msra.mxu0 0.0
  %129 = vmatpush.msra.mxu0 0.0
  %130 = vmatpush.msra.mxu0 0.0
  %131 = vmatpush.msra.mxu0 0.0
  %132 = vmatpush.msra.mxu0 0.0
  %133 = vmatpush.msra.mxu0 0.0
  %134 = vmatpush.msra.mxu0 0.0
  %135 = vmatpush.msra.mxu0 %v42
  %136 = vmatpush.msra.mxu0 %v38
  %137 = vmatmul.f32.gmra.mxu0 %v57
  %v138 = vpop.f32.mrf.mxu0
  %v139 = vadd.f32 %v48, %v138
  %140 = vmatmul.f32.gmra.mxu0 %v60
  %v141 = vpop.f32.mrf.mxu0
  %v142 = vadd.f32 %v48, %v141
  %143 = vmatmul.f32.gmra.mxu0 %v63
  %v144 = vpop.f32.mrf.mxu0
  %v145 = vadd.f32 %v48, %v144
  %146 = vmatmul.f32.gmra.mxu0 %v66
  %v147 = vpop.f32.mrf.mxu0
  %v148 = vadd.f32 %v48, %v147
  %149 = vmatmul.f32.gmra.mxu0 %v69
  %v150 = vpop.f32.mrf.mxu0
  %v151 = vadd.f32 %v48, %v150
  %152 = vmatmul.f32.gmra.mxu0 %v72
  %v153 = vpop.f32.mrf.mxu0
  %v154 = vadd.f32 %v48, %v153
  %155 = vmatmul.f32.gmra.mxu0 %v75
  %v156 = vpop.f32.mrf.mxu0
  %v157 = vadd.f32 %v48, %v156
  %158 = vmatmul.f32.gmra.mxu0 %v78
  %v159 = vpop.f32.mrf.mxu0
  %v160 = vadd.f32 %v48, %v159
  %161 = vdwg.mxu0
  %162 = vmatpush.msra.mxu0 0.0
  %163 = vmatpush.msra.mxu0 0.0
  %164 = vmatpush.msra.mxu0 0.0
  %165 = vmatpush.msra.mxu0 0.0
  %166 = vmatpush.msra.mxu0 0.0
  %167 = vmatpush.msra.mxu0 0.0
  %168 = vmatpush.msra.mxu0 0.0
  %169 = vmatpush.msra.mxu0 0.0
  %170 = vmatpush.msra.mxu0 0.0
  %171 = vmatpush.msra.mxu0 0.0
  %172 = vmatpush.msra.mxu0 0.0
  %173 = vmatpush.msra.mxu0 0.0
  %174 = vmatpush.msra.mxu0 0.0
  %175 = vmatpush.msra.mxu0 0.0
  %176 = vmatpush.msra.mxu0 %v43
  %177 = vmatpush.msra.mxu0 %v39
  %178 = vmatmul.f32.gmra.mxu0 %v57
  %v179 = vpop.f32.mrf.mxu0
  %v180 = vadd.f32 %v49, %v179
  %181 = vmatmul.f32.gmra.mxu0 %v60
  %v182 = vpop.f32.mrf.mxu0
  %v183 = vadd.f32 %v49, %v182
  %184 = vmatmul.f32.gmra.mxu0 %v63
  %v185 = vpop.f32.mrf.mxu0
  %v186 = vadd.f32 %v49, %v185
  %187 = vmatmul.f32.gmra.mxu0 %v66
  %v188 = vpop.f32.mrf.mxu0
  %v189 = vadd.f32 %v49, %v188
  %190 = vmatmul.f32.gmra.mxu0 %v69
  %v191 = vpop.f32.mrf.mxu0
  %v192 = vadd.f32 %v49, %v191
  %193 = vmatmul.f32.gmra.mxu0 %v72
  %v194 = vpop.f32.mrf.mxu0
  %v195 = vadd.f32 %v49, %v194
  %196 = vmatmul.f32.gmra.mxu0 %v75
  %v197 = vpop.f32.mrf.mxu0
  %v198 = vadd.f32 %v49, %v197
  %199 = vmatmul.f32.gmra.mxu0 %v78
  %v200 = vpop.f32.mrf.mxu0
  %v201 = vadd.f32 %v49, %v200
  %202 = vdwg.mxu0
  %203 = vmatpush.msra.mxu0 0.0
  %204 = vmatpush.msra.mxu0 0.0
  %205 = vmatpush.msra.mxu0 0.0
  %206 = vmatpush.msra.mxu0 0.0
  %207 = vmatpush.msra.mxu0 0.0
  %208 = vmatpush.msra.mxu0 0.0
  %209 = vmatpush.msra.mxu0 0.0
  %210 = vmatpush.msra.mxu0 0.0
  %211 = vmatpush.msra.mxu0 0.0
  %212 = vmatpush.msra.mxu0 0.0
  %213 = vmatpush.msra.mxu0 0.0
  %214 = vmatpush.msra.mxu0 0.0
  %215 = vmatpush.msra.mxu0 0.0
  %216 = vmatpush.msra.mxu0 0.0
  %217 = vmatpush.msra.mxu0 %v44
  %218 = vmatpush.msra.mxu0 %v40
  %219 = vmatmul.f32.gmra.mxu0 %v57
  %v220 = vpop.f32.mrf.mxu0
  %v221 = vadd.f32 %v50, %v220
  %222 = vmatmul.f32.gmra.mxu0 %v60
  %v223 = vpop.f32.mrf.mxu0
  %v224 = vadd.f32 %v50, %v223
  %225 = vmatmul.f32.gmra.mxu0 %v63
  %v226 = vpop.f32.mrf.mxu0
  %v227 = vadd.f32 %v50, %v226
  %228 = vmatmul.f32.gmra.mxu0 %v66
  %v229 = vpop.f32.mrf.mxu0
  %v230 = vadd.f32 %v50, %v229
  %231 = vmatmul.f32.gmra.mxu0 %v69
  %v232 = vpop.f32.mrf.mxu0
  %v233 = vadd.f32 %v50, %v232
  %234 = vmatmul.f32.gmra.mxu0 %v72
  %v235 = vpop.f32.mrf.mxu0
  %v236 = vadd.f32 %v50, %v235
  %237 = vmatmul.f32.gmra.mxu0 %v75
  %v238 = vpop.f32.mrf.mxu0
  %v239 = vadd.f32 %v50, %v238
  %240 = vmatmul.f32.gmra.mxu0 %v78
  %v241 = vpop.f32.mrf.mxu0
  %v242 = vadd.f32 %v50, %v241
  %243 = vdwg.mxu0
  %244 = vst [vmem:[#allocation2] sm:$0xff] %v98
  %245 = vst [vmem:[#allocation2 + $0x8] sm:$0xff] %v139
  %246 = vst [vmem:[#allocation2 + $0x10] sm:$0xff] %v180
  %247 = vst [vmem:[#allocation2 + $0x18] sm:$0xff] %v221
  %248 = vst [vmem:[#allocation2 + $0x20] sm:$0xff] %v101
  %249 = vst [vmem:[#allocation2 + $0x28] sm:$0xff] %v142
  %250 = vst [vmem:[#allocation2 + $0x30] sm:$0xff] %v183
  %251 = vst [vmem:[#allocation2 + $0x38] sm:$0xff] %v224
  %252 = vst [vmem:[#allocation2 + $0x40] sm:$0xff] %v104
  %253 = vst [vmem:[#allocation2 + $0x48] sm:$0xff] %v145
  %254 = vst [vmem:[#allocation2 + $0x50] sm:$0xff] %v186
  %255 = vst [vmem:[#allocation2 + $0x58] sm:$0xff] %v227
  %256 = vst [vmem:[#allocation2 + $0x60] sm:$0xff] %v107
  %257 = vst [vmem:[#allocation2 + $0x68] sm:$0xff] %v148
  %258 = vst [vmem:[#allocation2 + $0x70] sm:$0xff] %v189
  %259 = vst [vmem:[#allocation2 + $0x78] sm:$0xff] %v230
  %260 = vst [vmem:[#allocation2 + $0x80] sm:$0xff] %v110
  %261 = vst [vmem:[#allocation2 + $0x88] sm:$0xff] %v151
  %262 = vst [vmem:[#allocation2 + $0x90] sm:$0xff] %v192
  %263 = vst [vmem:[#allocation2 + $0x98] sm:$0xff] %v233
  %264 = vst [vmem:[#allocation2 + $0xa0] sm:$0xff] %v113
  %265 = vst [vmem:[#allocation2 + $0xa8] sm:$0xff] %v154
  %266 = vst [vmem:[#allocation2 + $0xb0] sm:$0xff] %v195
  %267 = vst [vmem:[#allocation2 + $0xb8] sm:$0xff] %v236
  %268 = vst [vmem:[#allocation2 + $0xc0] sm:$0xff] %v116
  %269 = vst [vmem:[#allocation2 + $0xc8] sm:$0xff] %v157
  %270 = vst [vmem:[#allocation2 + $0xd0] sm:$0xff] %v198
  %271 = vst [vmem:[#allocation2 + $0xd8] sm:$0xff] %v239
  %272 = vst [vmem:[#allocation2 + $0xe0] sm:$0xff] %v119
  %273 = vst [vmem:[#allocation2 + $0xe8] sm:$0xff] %v160
  %274 = vst [vmem:[#allocation2 + $0xf0] sm:$0xff] %v201
  %275 = vst [vmem:[#allocation2 + $0xf8] sm:$0xff] %v242
  loop: start=0, step=1, limit=8
  $region30: #{lstm_enc_forward.1} parent=0 // loop_pre_header
    _
  $region31: #{lstm_enc_forward.1} parent=0 // loop_header
    %s277 = sphi 0, %s281
    %p278 = scmp.ge.s32.totalorder %s277, 8
    %v282 = vphi 0.0, %v504
    %v283 = vphi 0.0, %v502
  $region32: #{lstm_enc_forward.1} parent=0 // loop_header_branch
    %280 = sbr.rel (%p278) target = $region36
  $region33: #{lstm_enc_forward.1} parent=0 // loop_body
    %s284 = smul.u32 %s277, 8
    %s285 = sshra.s32 %s284, 3
    %s286 = sand.u32 %s284, 7
    %s287 = smul.u32 %s285, 4
    %s288 = smul.addr %s287, 8
    %s289 = scalar_lea.vmem [#allocation2], %s288
    %v290 = vld [vmem:[%s289] sm:$0xff]
    %v291 = vld [vmem:[%s289 + $0x8] sm:$0xff]
    %v292 = vld [vmem:[%s289 + $0x10] sm:$0xff]
    %v293 = vld [vmem:[%s289 + $0x18] sm:$0xff]
    %v294 = vld [vmem:[%s2] sm:$0xff]
    %v295 = vld [vmem:[%s2 + $0x8] sm:$0xff]
    %v296 = vld [vmem:[%s2 + $0x10] sm:$0xff]
    %v297 = vld [vmem:[%s2 + $0x18] sm:$0xff]
    %v298 = vld [vmem:[%s2 + $0x20] sm:$0xff]
    %v299 = vld [vmem:[%s2 + $0x28] sm:$0xff]
    %v300 = vld [vmem:[%s2 + $0x30] sm:$0xff]
    %v301 = vld [vmem:[%s2 + $0x38] sm:$0xff]
    %v302 = vld [vmem:[%s2 + $0x40] sm:$0xff]
    %v303 = vld [vmem:[%s2 + $0x48] sm:$0xff]
    %v304 = vld [vmem:[%s2 + $0x50] sm:$0xff]
    %v305 = vld [vmem:[%s2 + $0x58] sm:$0xff]
    %v306 = vld [vmem:[%s2 + $0x60] sm:$0xff]
    %v307 = vld [vmem:[%s2 + $0x68] sm:$0xff]
    %v308 = vld [vmem:[%s2 + $0x70] sm:$0xff]
    %v309 = vld [vmem:[%s2 + $0x78] sm:$0xff]
    %v310 = vld [vmem:[%s2 + $0x80] sm:$0xff]
    %v311 = vld [vmem:[%s2 + $0x88] sm:$0xff]
    %v312 = vld [vmem:[%s2 + $0x90] sm:$0xff]
    %v313 = vld [vmem:[%s2 + $0x98] sm:$0xff]
    %v314 = vld [vmem:[%s2 + $0xa0] sm:$0xff]
    %v315 = vld [vmem:[%s2 + $0xa8] sm:$0xff]
    %v316 = vld [vmem:[%s2 + $0xb0] sm:$0xff]
    %v317 = vld [vmem:[%s2 + $0xb8] sm:$0xff]
    %v318 = vld [vmem:[%s2 + $0xc0] sm:$0xff]
    %v319 = vld [vmem:[%s2 + $0xc8] sm:$0xff]
    %v320 = vld [vmem:[%s2 + $0xd0] sm:$0xff]
    %v321 = vld [vmem:[%s2 + $0xd8] sm:$0xff]
    %v322 = vld [vmem:[%s2 + $0xe0] sm:$0xff]
    %v323 = vld [vmem:[%s2 + $0xe8] sm:$0xff]
    %v324 = vld [vmem:[%s2 + $0xf0] sm:$0xff]
    %v325 = vld [vmem:[%s2 + $0xf8] sm:$0xff]
    %v326 = vld [vmem:[%s2 + $0x100] sm:$0xff]
    %v327 = vld [vmem:[%s2 + $0x108] sm:$0xff]
    %v328 = vld [vmem:[%s2 + $0x110] sm:$0xff]
    %v329 = vld [vmem:[%s2 + $0x118] sm:$0xff]
    %v330 = vld [vmem:[%s2 + $0x120] sm:$0xff]
    %v331 = vld [vmem:[%s2 + $0x128] sm:$0xff]
    %v332 = vld [vmem:[%s2 + $0x130] sm:$0xff]
    %v333 = vld [vmem:[%s2 + $0x138] sm:$0xff]
    %v334 = vld [vmem:[%s2 + $0x140] sm:$0xff]
    %v335 = vld [vmem:[%s2 + $0x148] sm:$0xff]
    %v336 = vld [vmem:[%s2 + $0x150] sm:$0xff]
    %v337 = vld [vmem:[%s2 + $0x158] sm:$0xff]
    %v338 = vld [vmem:[%s2 + $0x160] sm:$0xff]
    %v339 = vld [vmem:[%s2 + $0x168] sm:$0xff]
    %v340 = vld [vmem:[%s2 + $0x170] sm:$0xff]
    %v341 = vld [vmem:[%s2 + $0x178] sm:$0xff]
    %v342 = vld [vmem:[%s2 + $0x180] sm:$0xff]
    %v343 = vld [vmem:[%s2 + $0x188] sm:$0xff]
    %v344 = vld [vmem:[%s2 + $0x190] sm:$0xff]
    %v345 = vld [vmem:[%s2 + $0x198] sm:$0xff]
    %v346 = vld [vmem:[%s2 + $0x1a0] sm:$0xff]
    %v347 = vld [vmem:[%s2 + $0x1a8] sm:$0xff]
    %v348 = vld [vmem:[%s2 + $0x1b0] sm:$0xff]
    %v349 = vld [vmem:[%s2 + $0x1b8] sm:$0xff]
    %v350 = vld [vmem:[%s2 + $0x1c0] sm:$0xff]
    %v351 = vld [vmem:[%s2 + $0x1c8] sm:$0xff]
    %v352 = vld [vmem:[%s2 + $0x1d0] sm:$0xff]
    %v353 = vld [vmem:[%s2 + $0x1d8] sm:$0xff]
    %v354 = vld [vmem:[%s2 + $0x1e0] sm:$0xff]
    %v355 = vld [vmem:[%s2 + $0x1e8] sm:$0xff]
    %v356 = vld [vmem:[%s2 + $0x1f0] sm:$0xff]
    %v357 = vld [vmem:[%s2 + $0x1f8] sm:$0xff]
    %358 = vmatpush.msra.mxu0 %v354
    %359 = vmatpush.msra.mxu0 %v350
    %360 = vmatpush.msra.mxu0 %v346
    %361 = vmatpush.msra.mxu0 %v342
    %362 = vmatpush.msra.mxu0 %v338
    %363 = vmatpush.msra.mxu0 %v334
    %364 = vmatpush.msra.mxu0 %v330
    %365 = vmatpush.msra.mxu0 %v326
    %366 = vmatpush.msra.mxu0 %v322
    %367 = vmatpush.msra.mxu0 %v318
    %368 = vmatpush.msra.mxu0 %v314
    %369 = vmatpush.msra.mxu0 %v310
    %370 = vmatpush.msra.mxu0 %v306
    %371 = vmatpush.msra.mxu0 %v302
    %372 = vmatpush.msra.mxu0 %v298
    %373 = vmatpush.msra.mxu0 %v294
    %374 = vmatmul.f32.gmra.mxu0 %v282
    %v375 = vpop.f32.mrf.mxu0
    %v376 = vadd.f32 0.0, %v375
    %377 = vdwg.mxu0
    %378 = vmatpush.msra.mxu0 %v355
    %379 = vmatpush.msra.mxu0 %v351
    %380 = vmatpush.msra.mxu0 %v347
    %381 = vmatpush.msra.mxu0 %v343
    %382 = vmatpush.msra.mxu0 %v339
    %383 = vmatpush.msra.mxu0 %v335
    %384 = vmatpush.msra.mxu0 %v331
    %385 = vmatpush.msra.mxu0 %v327
    %386 = vmatpush.msra.mxu0 %v323
    %387 = vmatpush.msra.mxu0 %v319
    %388 = vmatpush.msra.mxu0 %v315
    %389 = vmatpush.msra.mxu0 %v311
    %390 = vmatpush.msra.mxu0 %v307
    %391 = vmatpush.msra.mxu0 %v303
    %392 = vmatpush.msra.mxu0 %v299
    %393 = vmatpush.msra.mxu0 %v295
    %394 = vmatmul.f32.gmra.mxu0 %v282
    %v395 = vpop.f32.mrf.mxu0
    %v396 = vadd.f32 0.0, %v395
    %397 = vdwg.mxu0
    %398 = vmatpush.msra.mxu0 %v356
    %399 = vmatpush.msra.mxu0 %v352
    %400 = vmatpush.msra.mxu0 %v348
    %401 = vmatpush.msra.mxu0 %v344
    %402 = vmatpush.msra.mxu0 %v340
    %403 = vmatpush.msra.mxu0 %v336
    %404 = vmatpush.msra.mxu0 %v332
    %405 = vmatpush.msra.mxu0 %v328
    %406 = vmatpush.msra.mxu0 %v324
    %407 = vmatpush.msra.mxu0 %v320
    %408 = vmatpush.msra.mxu0 %v316
    %409 = vmatpush.msra.mxu0 %v312
    %410 = vmatpush.msra.mxu0 %v308
    %411 = vmatpush.msra.mxu0 %v304
    %412 = vmatpush.msra.mxu0 %v300
    %413 = vmatpush.msra.mxu0 %v296
    %414 = vmatmul.f32.gmra.mxu0 %v282
    %v415 = vpop.f32.mrf.mxu0
    %v416 = vadd.f32 0.0, %v415
    %417 = vdwg.mxu0
    %418 = vmatpush.msra.mxu0 %v357
    %419 = vmatpush.msra.mxu0 %v353
    %420 = vmatpush.msra.mxu0 %v349
    %421 = vmatpush.msra.mxu0 %v345
    %422 = vmatpush.msra.mxu0 %v341
    %423 = vmatpush.msra.mxu0 %v337
    %424 = vmatpush.msra.mxu0 %v333
    %425 = vmatpush.msra.mxu0 %v329
    %426 = vmatpush.msra.mxu0 %v325
    %427 = vmatpush.msra.mxu0 %v321
    %428 = vmatpush.msra.mxu0 %v317
    %429 = vmatpush.msra.mxu0 %v313
    %430 = vmatpush.msra.mxu0 %v309
    %431 = vmatpush.msra.mxu0 %v305
    %432 = vmatpush.msra.mxu0 %v301
    %433 = vmatpush.msra.mxu0 %v297
    %434 = vmatmul.f32.gmra.mxu0 %v282
    %v435 = vpop.f32.mrf.mxu0
    %v436 = vadd.f32 0.0, %v435
    %437 = vdwg.mxu0
    %v438 = vadd.f32 %v290, %v376
    %v439 = vadd.f32 %v291, %v396
    %v440 = vadd.f32 %v292, %v416
    %v441 = vadd.f32 %v293, %v436
    %v442 = vxor.u32 %v438, 2147483648
    %v443 = vmul.f32 %v442, 1.442695
    %v444 = vpow.pop %v443
    %v445 = vadd.f32 %v444, 1.0
    %v446 = vrcp.pop %v445
    %v447 = vmul.f32 %v445, %v446
    %v448 = vsub.f32 1.0, %v447
    %v449 = vmul.f32 %v446, %v448
    %v450 = vadd.f32 %v446, %v449
    %vm451 = vweird.f32 %v445
    %vm452 = vweird.f32 %v446
    %vm453 = vmor %vm451, %vm452
    %v454 = vsel %vm453, %v446, %v450
    %v455 = vand.u32 2147483647, %v445
    %vm456 = vcmp.eq.f32.partialorder %v455, 8.507059e+37
    %v457 = vand.u32 %v445, 2147483648
    %v458 = vor.u32 1.1754944e-38, %v457
    %v459 = vsel %vm456, %v458, %v454
    %v460 = vmul.f32 1.0, %v459
    %v461 = vxor.u32 %v439, 2147483648
    %v462 = vmul.f32 %v461, 1.442695
    %v463 = vpow.pop %v462
    %v464 = vadd.f32 %v463, 1.0
    %v465 = vrcp.pop %v464
    %v466 = vmul.f32 %v464, %v465
    %v467 = vsub.f32 1.0, %v466
    %v468 = vmul.f32 %v465, %v467
    %v469 = vadd.f32 %v465, %v468
    %vm470 = vweird.f32 %v464
    %vm471 = vweird.f32 %v465
    %vm472 = vmor %vm470, %vm471
    %v473 = vsel %vm472, %v465, %v469
    %v474 = vand.u32 2147483647, %v464
    %vm475 = vcmp.eq.f32.partialorder %v474, 8.507059e+37
    %v476 = vand.u32 %v464, 2147483648
    %v477 = vor.u32 1.1754944e-38, %v476
    %v478 = vsel %vm475, %v477, %v473
    %v479 = vmul.f32 1.0, %v478
    %v480 = vtanh.pop %v440
    %v481 = vxor.u32 %v441, 2147483648
    %v482 = vmul.f32 %v481, 1.442695
    %v483 = vpow.pop %v482
    %v484 = vadd.f32 %v483, 1.0
    %v485 = vrcp.pop %v484
    %v486 = vmul.f32 %v484, %v485
    %v487 = vsub.f32 1.0, %v486
    %v488 = vmul.f32 %v485, %v487
    %v489 = vadd.f32 %v485, %v488
    %vm490 = vweird.f32 %v484
    %vm491 = vweird.f32 %v485
    %vm492 = vmor %vm490, %vm491
    %v493 = vsel %vm492, %v485, %v489
    %v494 = vand.u32 2147483647, %v484
    %vm495 = vcmp.eq.f32.partialorder %v494, 8.507059e+37
    %v496 = vand.u32 %v484, 2147483648
    %v497 = vor.u32 1.1754944e-38, %v496
    %v498 = vsel %vm495, %v497, %v493
    %v499 = vmul.f32 1.0, %v498
    %v500 = vmul.f32 %v479, %v283
    %v501 = vmul.f32 %v460, %v480
    %v502 = vadd.f32 %v500, %v501
    %v503 = vtanh.pop %v502
    %v504 = vmul.f32 %v499, %v503
    %s505 = scalar_lea.vmem [#allocation3], %s284
    %506 = vst [vmem:[%s505] sm:$0xff] %v504
  $region34: #{lstm_enc_forward.1} parent=0 // loop_footer
    %s281 = sadd.s32 1, %s277
  $region35: #{lstm_enc_forward.1} parent=0 // loop_footer_branch
    %276 = sbr.rel target = $region31
  $region36: #{lstm_enc_forward.1} parent=0 // loop_exit
    _
  %507 = vst [vmem:[%s8] sm:$0xff] %v282
  %508 = vst [vmem:[%s9] sm:$0xff] %v283
  %v509 = vld [vmem:[#allocation3] sm:$0xff]
  %v510 = vld [vmem:[#allocation3 + $0x8] sm:$0xff]
  %v511 = vld [vmem:[#allocation3 + $0x10] sm:$0xff]
  %v512 = vld [vmem:[#allocation3 + $0x18] sm:$0xff]
  %v513 = vld [vmem:[#allocation3 + $0x20] sm:$0xff]
  %v514 = vld [vmem:[#allocation3 + $0x28] sm:$0xff]
  %v515 = vld [vmem:[#allocation3 + $0x30] sm:$0xff]
  %v516 = vld [vmem:[#allocation3 + $0x38] sm:$0xff]
  %v517 = vld [vmem:[%s4] sm:$0xff]
  %v518 = vld [vmem:[%s4 + $0x8] sm:$0xff]
  %v519 = vld [vmem:[%s4 + $0x10] sm:$0xff]
  %v520 = vld [vmem:[%s4 + $0x18] sm:$0xff]
  %v521 = vld [vmem:[%s4 + $0x20] sm:$0xff]
  %v522 = vld [vmem:[%s4 + $0x28] sm:$0xff]
  %v523 = vld [vmem:[%s4 + $0x30] sm:$0xff]
  %v524 = vld [vmem:[%s4 + $0x38] sm:$0xff]
  %v525 = vld [vmem:[%s4 + $0x40] sm:$0xff]
  %v526 = vld [vmem:[%s4 + $0x48] sm:$0xff]
  %v527 = vld [vmem:[%s4 + $0x50] sm:$0xff]
  %v528 = vld [vmem:[%s4 + $0x58] sm:$0xff]
  %v529 = vld [vmem:[%s4 + $0x60] sm:$0xff]
  %v530 = vld [vmem:[%s4 + $0x68] sm:$0xff]
  %v531 = vld [vmem:[%s4 + $0x70] sm:$0xff]
  %v532 = vld [vmem:[%s4 + $0x78] sm:$0xff]
  %v533 = vld [vmem:[%s4 + $0x80] sm:$0xff]
  %v534 = vld [vmem:[%s4 + $0x88] sm:$0xff]
  %v535 = vld [vmem:[%s4 + $0x90] sm:$0xff]
  %v536 = vld [vmem:[%s4 + $0x98] sm:$0xff]
  %v537 = vld [vmem:[%s4 + $0xa0] sm:$0xff]
  %v538 = vld [vmem:[%s4 + $0xa8] sm:$0xff]
  %v539 = vld [vmem:[%s4 + $0xb0] sm:$0xff]
  %v540 = vld [vmem:[%s4 + $0xb8] sm:$0xff]
  %v541 = vld [vmem:[%s4 + $0xc0] sm:$0xff]
  %v542 = vld [vmem:[%s4 + $0xc8] sm:$0xff]
  %v543 = vld [vmem:[%s4 + $0xd0] sm:$0xff]
  %v544 = vld [vmem:[%s4 + $0xd8] sm:$0xff]
  %v545 = vld [vmem:[%s4 + $0xe0] sm:$0xff]
  %v546 = vld [vmem:[%s4 + $0xe8] sm:$0xff]
  %v547 = vld [vmem:[%s4 + $0xf0] sm:$0xff]
  %v548 = vld [vmem:[%s4 + $0xf8] sm:$0xff]
  %v549 = vld [vmem:[%s4 + $0x100] sm:$0xff]
  %v550 = vld [vmem:[%s4 + $0x108] sm:$0xff]
  %v551 = vld [vmem:[%s4 + $0x110] sm:$0xff]
  %v552 = vld [vmem:[%s4 + $0x118] sm:$0xff]
  %v553 = vld [vmem:[%s4 + $0x120] sm:$0xff]
  %v554 = vld [vmem:[%s4 + $0x128] sm:$0xff]
  %v555 = vld [vmem:[%s4 + $0x130] sm:$0xff]
  %v556 = vld [vmem:[%s4 + $0x138] sm:$0xff]
  %v557 = vld [vmem:[%s4 + $0x140] sm:$0xff]
  %v558 = vld [vmem:[%s4 + $0x148] sm:$0xff]
  %v559 = vld [vmem:[%s4 + $0x150] sm:$0xff]
  %v560 = vld [vmem:[%s4 + $0x158] sm:$0xff]
  %v561 = vld [vmem:[%s4 + $0x160] sm:$0xff]
  %v562 = vld [vmem:[%s4 + $0x168] sm:$0xff]
  %v563 = vld [vmem:[%s4 + $0x170] sm:$0xff]
  %v564 = vld [vmem:[%s4 + $0x178] sm:$0xff]
  %v565 = vld [vmem:[%s4 + $0x180] sm:$0xff]
  %v566 = vld [vmem:[%s4 + $0x188] sm:$0xff]
  %v567 = vld [vmem:[%s4 + $0x190] sm:$0xff]
  %v568 = vld [vmem:[%s4 + $0x198] sm:$0xff]
  %v569 = vld [vmem:[%s4 + $0x1a0] sm:$0xff]
  %v570 = vld [vmem:[%s4 + $0x1a8] sm:$0xff]
  %v571 = vld [vmem:[%s4 + $0x1b0] sm:$0xff]
  %v572 = vld [vmem:[%s4 + $0x1b8] sm:$0xff]
  %v573 = vld [vmem:[%s4 + $0x1c0] sm:$0xff]
  %v574 = vld [vmem:[%s4 + $0x1c8] sm:$0xff]
  %v575 = vld [vmem:[%s4 + $0x1d0] sm:$0xff]
  %v576 = vld [vmem:[%s4 + $0x1d8] sm:$0xff]
  %v577 = vld [vmem:[%s4 + $0x1e0] sm:$0xff]
  %v578 = vld [vmem:[%s4 + $0x1e8] sm:$0xff]
  %v579 = vld [vmem:[%s4 + $0x1f0] sm:$0xff]
  %v580 = vld [vmem:[%s4 + $0x1f8] sm:$0xff]
  %v581 = vld [vmem:[%s6] sm:$0xf]
  %v583 = vperm.slane %v581, 0
  %v584 = vperm.slane %v581, 1
  %v585 = vperm.slane %v581, 2
  %v586 = vperm.slane %v581, 3
  %591 = vmatpush.msra.mxu0 %v577
  %592 = vmatpush.msra.mxu0 %v573
  %593 = vmatpush.msra.mxu0 %v569
  %594 = vmatpush.msra.mxu0 %v565
  %595 = vmatpush.msra.mxu0 %v561
  %596 = vmatpush.msra.mxu0 %v557
  %597 = vmatpush.msra.mxu0 %v553
  %598 = vmatpush.msra.mxu0 %v549
  %599 = vmatpush.msra.mxu0 %v545
  %600 = vmatpush.msra.mxu0 %v541
  %601 = vmatpush.msra.mxu0 %v537
  %602 = vmatpush.msra.mxu0 %v533
  %603 = vmatpush.msra.mxu0 %v529
  %604 = vmatpush.msra.mxu0 %v525
  %605 = vmatpush.msra.mxu0 %v521
  %606 = vmatpush.msra.mxu0 %v517
  %607 = vmatmul.f32.gmra.mxu0 %v509
  %v608 = vpop.f32.mrf.mxu0
  %v609 = vadd.f32 %v583, %v608
  %610 = vmatmul.f32.gmra.mxu0 %v510
  %v611 = vpop.f32.mrf.mxu0
  %v612 = vadd.f32 %v583, %v611
  %613 = vmatmul.f32.gmra.mxu0 %v511
  %v614 = vpop.f32.mrf.mxu0
  %v615 = vadd.f32 %v583, %v614
  %616 = vmatmul.f32.gmra.mxu0 %v512
  %v617 = vpop.f32.mrf.mxu0
  %v618 = vadd.f32 %v583, %v617
  %619 = vmatmul.f32.gmra.mxu0 %v513
  %v620 = vpop.f32.mrf.mxu0
  %v621 = vadd.f32 %v583, %v620
  %622 = vmatmul.f32.gmra.mxu0 %v514
  %v623 = vpop.f32.mrf.mxu0
  %v624 = vadd.f32 %v583, %v623
  %625 = vmatmul.f32.gmra.mxu0 %v515
  %v626 = vpop.f32.mrf.mxu0
  %v627 = vadd.f32 %v583, %v626
  %628 = vmatmul.f32.gmra.mxu0 %v516
  %v629 = vpop.f32.mrf.mxu0
  %v630 = vadd.f32 %v583, %v629
  %631 = vdwg.mxu0
  %632 = vmatpush.msra.mxu0 %v578
  %633 = vmatpush.msra.mxu0 %v574
  %634 = vmatpush.msra.mxu0 %v570
  %635 = vmatpush.msra.mxu0 %v566
  %636 = vmatpush.msra.mxu0 %v562
  %637 = vmatpush.msra.mxu0 %v558
  %638 = vmatpush.msra.mxu0 %v554
  %639 = vmatpush.msra.mxu0 %v550
  %640 = vmatpush.msra.mxu0 %v546
  %641 = vmatpush.msra.mxu0 %v542
  %642 = vmatpush.msra.mxu0 %v538
  %643 = vmatpush.msra.mxu0 %v534
  %644 = vmatpush.msra.mxu0 %v530
  %645 = vmatpush.msra.mxu0 %v526
  %646 = vmatpush.msra.mxu0 %v522
  %647 = vmatpush.msra.mxu0 %v518
  %648 = vmatmul.f32.gmra.mxu0 %v509
  %v649 = vpop.f32.mrf.mxu0
  %v650 = vadd.f32 %v584, %v649
  %651 = vmatmul.f32.gmra.mxu0 %v510
  %v652 = vpop.f32.mrf.mxu0
  %v653 = vadd.f32 %v584, %v652
  %654 = vmatmul.f32.gmra.mxu0 %v511
  %v655 = vpop.f32.mrf.mxu0
  %v656 = vadd.f32 %v584, %v655
  %657 = vmatmul.f32.gmra.mxu0 %v512
  %v658 = vpop.f32.mrf.mxu0
  %v659 = vadd.f32 %v584, %v658
  %660 = vmatmul.f32.gmra.mxu0 %v513
  %v661 = vpop.f32.mrf.mxu0
  %v662 = vadd.f32 %v584, %v661
  %663 = vmatmul.f32.gmra.mxu0 %v514
  %v664 = vpop.f32.mrf.mxu0
  %v665 = vadd.f32 %v584, %v664
  %666 = vmatmul.f32.gmra.mxu0 %v515
  %v667 = vpop.f32.mrf.mxu0
  %v668 = vadd.f32 %v584, %v667
  %669 = vmatmul.f32.gmra.mxu0 %v516
  %v670 = vpop.f32.mrf.mxu0
  %v671 = vadd.f32 %v584, %v670
  %672 = vdwg.mxu0
  %673 = vmatpush.msra.mxu0 %v579
  %674 = vmatpush.msra.mxu0 %v575
  %675 = vmatpush.msra.mxu0 %v571
  %676 = vmatpush.msra.mxu0 %v567
  %677 = vmatpush.msra.mxu0 %v563
  %678 = vmatpush.msra.mxu0 %v559
  %679 = vmatpush.msra.mxu0 %v555
  %680 = vmatpush.msra.mxu0 %v551
  %681 = vmatpush.msra.mxu0 %v547
  %682 = vmatpush.msra.mxu0 %v543
  %683 = vmatpush.msra.mxu0 %v539
  %684 = vmatpush.msra.mxu0 %v535
  %685 = vmatpush.msra.mxu0 %v531
  %686 = vmatpush.msra.mxu0 %v527
  %687 = vmatpush.msra.mxu0 %v523
  %688 = vmatpush.msra.mxu0 %v519
  %689 = vmatmul.f32.gmra.mxu0 %v509
  %v690 = vpop.f32.mrf.mxu0
  %v691 = vadd.f32 %v585, %v690
  %692 = vmatmul.f32.gmra.mxu0 %v510
  %v693 = vpop.f32.mrf.mxu0
  %v694 = vadd.f32 %v585, %v693
  %695 = vmatmul.f32.gmra.mxu0 %v511
  %v696 = vpop.f32.mrf.mxu0
  %v697 = vadd.f32 %v585, %v696
  %698 = vmatmul.f32.gmra.mxu0 %v512
  %v699 = vpop.f32.mrf.mxu0
  %v700 = vadd.f32 %v585, %v699
  %701 = vmatmul.f32.gmra.mxu0 %v513
  %v702 = vpop.f32.mrf.mxu0
  %v703 = vadd.f32 %v585, %v702
  %704 = vmatmul.f32.gmra.mxu0 %v514
  %v705 = vpop.f32.mrf.mxu0
  %v706 = vadd.f32 %v585, %v705
  %707 = vmatmul.f32.gmra.mxu0 %v515
  %v708 = vpop.f32.mrf.mxu0
  %v709 = vadd.f32 %v585, %v708
  %710 = vmatmul.f32.gmra.mxu0 %v516
  %v711 = vpop.f32.mrf.mxu0
  %v712 = vadd.f32 %v585, %v711
  %713 = vdwg.mxu0
  %714 = vmatpush.msra.mxu0 %v580
  %715 = vmatpush.msra.mxu0 %v576
  %716 = vmatpush.msra.mxu0 %v572
  %717 = vmatpush.msra.mxu0 %v568
  %718 = vmatpush.msra.mxu0 %v564
  %719 = vmatpush.msra.mxu0 %v560
  %720 = vmatpush.msra.mxu0 %v556
  %721 = vmatpush.msra.mxu0 %v552
  %722 = vmatpush.msra.mxu0 %v548
  %723 = vmatpush.msra.mxu0 %v544
  %724 = vmatpush.msra.mxu0 %v540
  %725 = vmatpush.msra.mxu0 %v536
  %726 = vmatpush.msra.mxu0 %v532
  %727 = vmatpush.msra.mxu0 %v528
  %728 = vmatpush.msra.mxu0 %v524
  %729 = vmatpush.msra.mxu0 %v520
  %730 = vmatmul.f32.gmra.mxu0 %v509
  %v731 = vpop.f32.mrf.mxu0
  %v732 = vadd.f32 %v586, %v731
  %733 = vmatmul.f32.gmra.mxu0 %v510
  %v734 = vpop.f32.mrf.mxu0
  %v735 = vadd.f32 %v586, %v734
  %736 = vmatmul.f32.gmra.mxu0 %v511
  %v737 = vpop.f32.mrf.mxu0
  %v738 = vadd.f32 %v586, %v737
  %739 = vmatmul.f32.gmra.mxu0 %v512
  %v740 = vpop.f32.mrf.mxu0
  %v741 = vadd.f32 %v586, %v740
  %742 = vmatmul.f32.gmra.mxu0 %v513
  %v743 = vpop.f32.mrf.mxu0
  %v744 = vadd.f32 %v586, %v743
  %745 = vmatmul.f32.gmra.mxu0 %v514
  %v746 = vpop.f32.mrf.mxu0
  %v747 = vadd.f32 %v586, %v746
  %748 = vmatmul.f32.gmra.mxu0 %v515
  %v749 = vpop.f32.mrf.mxu0
  %v750 = vadd.f32 %v586, %v749
  %751 = vmatmul.f32.gmra.mxu0 %v516
  %v752 = vpop.f32.mrf.mxu0
  %v753 = vadd.f32 %v586, %v752
  %754 = vdwg.mxu0
  %755 = vst [vmem:[#allocation2] sm:$0xff] %v609
  %756 = vst [vmem:[#allocation2 + $0x8] sm:$0xff] %v650
  %757 = vst [vmem:[#allocation2 + $0x10] sm:$0xff] %v691
  %758 = vst [vmem:[#allocation2 + $0x18] sm:$0xff] %v732
  %759 = vst [vmem:[#allocation2 + $0x20] sm:$0xff] %v612
  %760 = vst [vmem:[#allocation2 + $0x28] sm:$0xff] %v653
  %761 = vst [vmem:[#allocation2 + $0x30] sm:$0xff] %v694
  %762 = vst [vmem:[#allocation2 + $0x38] sm:$0xff] %v735
  %763 = vst [vmem:[#allocation2 + $0x40] sm:$0xff] %v615
  %764 = vst [vmem:[#allocation2 + $0x48] sm:$0xff] %v656
  %765 = vst [vmem:[#allocation2 + $0x50] sm:$0xff] %v697
  %766 = vst [vmem:[#allocation2 + $0x58] sm:$0xff] %v738
  %767 = vst [vmem:[#allocation2 + $0x60] sm:$0xff] %v618
  %768 = vst [vmem:[#allocation2 + $0x68] sm:$0xff] %v659
  %769 = vst [vmem:[#allocation2 + $0x70] sm:$0xff] %v700
  %770 = vst [vmem:[#allocation2 + $0x78] sm:$0xff] %v741
  %771 = vst [vmem:[#allocation2 + $0x80] sm:$0xff] %v621
  %772 = vst [vmem:[#allocation2 + $0x88] sm:$0xff] %v662
  %773 = vst [vmem:[#allocation2 + $0x90] sm:$0xff] %v703
  %774 = vst [vmem:[#allocation2 + $0x98] sm:$0xff] %v744
  %775 = vst [vmem:[#allocation2 + $0xa0] sm:$0xff] %v624
  %776 = vst [vmem:[#allocation2 + $0xa8] sm:$0xff] %v665
  %777 = vst [vmem:[#allocation2 + $0xb0] sm:$0xff] %v706
  %778 = vst [vmem:[#allocation2 + $0xb8] sm:$0xff] %v747
  %779 = vst [vmem:[#allocation2 + $0xc0] sm:$0xff] %v627
  %780 = vst [vmem:[#allocation2 + $0xc8] sm:$0xff] %v668
  %781 = vst [vmem:[#allocation2 + $0xd0] sm:$0xff] %v709
  %782 = vst [vmem:[#allocation2 + $0xd8] sm:$0xff] %v750
  %783 = vst [vmem:[#allocation2 + $0xe0] sm:$0xff] %v630
  %784 = vst [vmem:[#allocation2 + $0xe8] sm:$0xff] %v671
  %785 = vst [vmem:[#allocation2 + $0xf0] sm:$0xff] %v712
  %786 = vst [vmem:[#allocation2 + $0xf8] sm:$0xff] %v753
  loop: start=0, step=1, limit=8
  $region37: #{lstm_enc_forward.1} parent=0 // loop_pre_header
    _
  $region38: #{lstm_enc_forward.1} parent=0 // loop_header
    %s788 = sphi 0, %s792
    %p789 = scmp.ge.s32.totalorder %s788, 8
    %v793 = vphi 0.0, %v1015
    %v794 = vphi 0.0, %v1013
  $region39: #{lstm_enc_forward.1} parent=0 // loop_header_branch
    %791 = sbr.rel (%p789) target = $region43
  $region40: #{lstm_enc_forward.1} parent=0 // loop_body
    %s795 = smul.u32 %s788, 8
    %s796 = sshra.s32 %s795, 3
    %s797 = sand.u32 %s795, 7
    %s798 = smul.u32 %s796, 4
    %s799 = smul.addr %s798, 8
    %s800 = scalar_lea.vmem [#allocation2], %s799
    %v801 = vld [vmem:[%s800] sm:$0xff]
    %v802 = vld [vmem:[%s800 + $0x8] sm:$0xff]
    %v803 = vld [vmem:[%s800 + $0x10] sm:$0xff]
    %v804 = vld [vmem:[%s800 + $0x18] sm:$0xff]
    %v805 = vld [vmem:[%s5] sm:$0xff]
    %v806 = vld [vmem:[%s5 + $0x8] sm:$0xff]
    %v807 = vld [vmem:[%s5 + $0x10] sm:$0xff]
    %v808 = vld [vmem:[%s5 + $0x18] sm:$0xff]
    %v809 = vld [vmem:[%s5 + $0x20] sm:$0xff]
    %v810 = vld [vmem:[%s5 + $0x28] sm:$0xff]
    %v811 = vld [vmem:[%s5 + $0x30] sm:$0xff]
    %v812 = vld [vmem:[%s5 + $0x38] sm:$0xff]
    %v813 = vld [vmem:[%s5 + $0x40] sm:$0xff]
    %v814 = vld [vmem:[%s5 + $0x48] sm:$0xff]
    %v815 = vld [vmem:[%s5 + $0x50] sm:$0xff]
    %v816 = vld [vmem:[%s5 + $0x58] sm:$0xff]
    %v817 = vld [vmem:[%s5 + $0x60] sm:$0xff]
    %v818 = vld [vmem:[%s5 + $0x68] sm:$0xff]
    %v819 = vld [vmem:[%s5 + $0x70] sm:$0xff]
    %v820 = vld [vmem:[%s5 + $0x78] sm:$0xff]
    %v821 = vld [vmem:[%s5 + $0x80] sm:$0xff]
    %v822 = vld [vmem:[%s5 + $0x88] sm:$0xff]
    %v823 = vld [vmem:[%s5 + $0x90] sm:$0xff]
    %v824 = vld [vmem:[%s5 + $0x98] sm:$0xff]
    %v825 = vld [vmem:[%s5 + $0xa0] sm:$0xff]
    %v826 = vld [vmem:[%s5 + $0xa8] sm:$0xff]
    %v827 = vld [vmem:[%s5 + $0xb0] sm:$0xff]
    %v828 = vld [vmem:[%s5 + $0xb8] sm:$0xff]
    %v829 = vld [vmem:[%s5 + $0xc0] sm:$0xff]
    %v830 = vld [vmem:[%s5 + $0xc8] sm:$0xff]
    %v831 = vld [vmem:[%s5 + $0xd0] sm:$0xff]
    %v832 = vld [vmem:[%s5 + $0xd8] sm:$0xff]
    %v833 = vld [vmem:[%s5 + $0xe0] sm:$0xff]
    %v834 = vld [vmem:[%s5 + $0xe8] sm:$0xff]
    %v835 = vld [vmem:[%s5 + $0xf0] sm:$0xff]
    %v836 = vld [vmem:[%s5 + $0xf8] sm:$0xff]
    %v837 = vld [vmem:[%s5 + $0x100] sm:$0xff]
    %v838 = vld [vmem:[%s5 + $0x108] sm:$0xff]
    %v839 = vld [vmem:[%s5 + $0x110] sm:$0xff]
    %v840 = vld [vmem:[%s5 + $0x118] sm:$0xff]
    %v841 = vld [vmem:[%s5 + $0x120] sm:$0xff]
    %v842 = vld [vmem:[%s5 + $0x128] sm:$0xff]
    %v843 = vld [vmem:[%s5 + $0x130] sm:$0xff]
    %v844 = vld [vmem:[%s5 + $0x138] sm:$0xff]
    %v845 = vld [vmem:[%s5 + $0x140] sm:$0xff]
    %v846 = vld [vmem:[%s5 + $0x148] sm:$0xff]
    %v847 = vld [vmem:[%s5 + $0x150] sm:$0xff]
    %v848 = vld [vmem:[%s5 + $0x158] sm:$0xff]
    %v849 = vld [vmem:[%s5 + $0x160] sm:$0xff]
    %v850 = vld [vmem:[%s5 + $0x168] sm:$0xff]
    %v851 = vld [vmem:[%s5 + $0x170] sm:$0xff]
    %v852 = vld [vmem:[%s5 + $0x178] sm:$0xff]
    %v853 = vld [vmem:[%s5 + $0x180] sm:$0xff]
    %v854 = vld [vmem:[%s5 + $0x188] sm:$0xff]
    %v855 = vld [vmem:[%s5 + $0x190] sm:$0xff]
    %v856 = vld [vmem:[%s5 + $0x198] sm:$0xff]
    %v857 = vld [vmem:[%s5 + $0x1a0] sm:$0xff]
    %v858 = vld [vmem:[%s5 + $0x1a8] sm:$0xff]
    %v859 = vld [vmem:[%s5 + $0x1b0] sm:$0xff]
    %v860 = vld [vmem:[%s5 + $0x1b8] sm:$0xff]
    %v861 = vld [vmem:[%s5 + $0x1c0] sm:$0xff]
    %v862 = vld [vmem:[%s5 + $0x1c8] sm:$0xff]
    %v863 = vld [vmem:[%s5 + $0x1d0] sm:$0xff]
    %v864 = vld [vmem:[%s5 + $0x1d8] sm:$0xff]
    %v865 = vld [vmem:[%s5 + $0x1e0] sm:$0xff]
    %v866 = vld [vmem:[%s5 + $0x1e8] sm:$0xff]
    %v867 = vld [vmem:[%s5 + $0x1f0] sm:$0xff]
    %v868 = vld [vmem:[%s5 + $0x1f8] sm:$0xff]
    %869 = vmatpush.msra.mxu0 %v865
    %870 = vmatpush.msra.mxu0 %v861
    %871 = vmatpush.msra.mxu0 %v857
    %872 = vmatpush.msra.mxu0 %v853
    %873 = vmatpush.msra.mxu0 %v849
    %874 = vmatpush.msra.mxu0 %v845
    %875 = vmatpush.msra.mxu0 %v841
    %876 = vmatpush.msra.mxu0 %v837
    %877 = vmatpush.msra.mxu0 %v833
    %878 = vmatpush.msra.mxu0 %v829
    %879 = vmatpush.msra.mxu0 %v825
    %880 = vmatpush.msra.mxu0 %v821
    %881 = vmatpush.msra.mxu0 %v817
    %882 = vmatpush.msra.mxu0 %v813
    %883 = vmatpush.msra.mxu0 %v809
    %884 = vmatpush.msra.mxu0 %v805
    %885 = vmatmul.f32.gmra.mxu0 %v793
    %v886 = vpop.f32.mrf.mxu0
    %v887 = vadd.f32 0.0, %v886
    %888 = vdwg.mxu0
    %889 = vmatpush.msra.mxu0 %v866
    %890 = vmatpush.msra.mxu0 %v862
    %891 = vmatpush.msra.mxu0 %v858
    %892 = vmatpush.msra.mxu0 %v854
    %893 = vmatpush.msra.mxu0 %v850
    %894 = vmatpush.msra.mxu0 %v846
    %895 = vmatpush.msra.mxu0 %v842
    %896 = vmatpush.msra.mxu0 %v838
    %897 = vmatpush.msra.mxu0 %v834
    %898 = vmatpush.msra.mxu0 %v830
    %899 = vmatpush.msra.mxu0 %v826
    %900 = vmatpush.msra.mxu0 %v822
    %901 = vmatpush.msra.mxu0 %v818
    %902 = vmatpush.msra.mxu0 %v814
    %903 = vmatpush.msra.mxu0 %v810
    %904 = vmatpush.msra.mxu0 %v806
    %905 = vmatmul.f32.gmra.mxu0 %v793
    %v906 = vpop.f32.mrf.mxu0
    %v907 = vadd.f32 0.0, %v906
    %908 = vdwg.mxu0
    %909 = vmatpush.msra.mxu0 %v867
    %910 = vmatpush.msra.mxu0 %v863
    %911 = vmatpush.msra.mxu0 %v859
    %912 = vmatpush.msra.mxu0 %v855
    %913 = vmatpush.msra.mxu0 %v851
    %914 = vmatpush.msra.mxu0 %v847
    %915 = vmatpush.msra.mxu0 %v843
    %916 = vmatpush.msra.mxu0 %v839
    %917 = vmatpush.msra.mxu0 %v835
    %918 = vmatpush.msra.mxu0 %v831
    %919 = vmatpush.msra.mxu0 %v827
    %920 = vmatpush.msra.mxu0 %v823
    %921 = vmatpush.msra.mxu0 %v819
    %922 = vmatpush.msra.mxu0 %v815
    %923 = vmatpush.msra.mxu0 %v811
    %924 = vmatpush.msra.mxu0 %v807
    %925 = vmatmul.f32.gmra.mxu0 %v793
    %v926 = vpop.f32.mrf.mxu0
    %v927 = vadd.f32 0.0, %v926
    %928 = vdwg.mxu0
    %929 = vmatpush.msra.mxu0 %v868
    %930 = vmatpush.msra.mxu0 %v864
    %931 = vmatpush.msra.mxu0 %v860
    %932 = vmatpush.msra.mxu0 %v856
    %933 = vmatpush.msra.mxu0 %v852
    %934 = vmatpush.msra.mxu0 %v848
    %935 = vmatpush.msra.mxu0 %v844
    %936 = vmatpush.msra.mxu0 %v840
    %937 = vmatpush.msra.mxu0 %v836
    %938 = vmatpush.msra.mxu0 %v832
    %939 = vmatpush.msra.mxu0 %v828
    %940 = vmatpush.msra.mxu0 %v824
    %941 = vmatpush.msra.mxu0 %v820
    %942 = vmatpush.msra.mxu0 %v816
    %943 = vmatpush.msra.mxu0 %v812
    %944 = vmatpush.msra.mxu0 %v808
    %945 = vmatmul.f32.gmra.mxu0 %v793
    %v946 = vpop.f32.mrf.mxu0
    %v947 = vadd.f32 0.0, %v946
    %948 = vdwg.mxu0
    %v949 = vadd.f32 %v801, %v887
    %v950 = vadd.f32 %v802, %v907
    %v951 = vadd.f32 %v803, %v927
    %v952 = vadd.f32 %v804, %v947
    %v953 = vxor.u32 %v949, 2147483648
    %v954 = vmul.f32 %v953, 1.442695
    %v955 = vpow.pop %v954
    %v956 = vadd.f32 %v955, 1.0
    %v957 = vrcp.pop %v956
    %v958 = vmul.f32 %v956, %v957
    %v959 = vsub.f32 1.0, %v958
    %v960 = vmul.f32 %v957, %v959
    %v961 = vadd.f32 %v957, %v960
    %vm962 = vweird.f32 %v956
    %vm963 = vweird.f32 %v957
    %vm964 = vmor %vm962, %vm963
    %v965 = vsel %vm964, %v957, %v961
    %v966 = vand.u32 2147483647, %v956
    %vm967 = vcmp.eq.f32.partialorder %v966, 8.507059e+37
    %v968 = vand.u32 %v956, 2147483648
    %v969 = vor.u32 1.1754944e-38, %v968
    %v970 = vsel %vm967, %v969, %v965
    %v971 = vmul.f32 1.0, %v970
    %v972 = vxor.u32 %v950, 2147483648
    %v973 = vmul.f32 %v972, 1.442695
    %v974 = vpow.pop %v973
    %v975 = vadd.f32 %v974, 1.0
    %v976 = vrcp.pop %v975
    %v977 = vmul.f32 %v975, %v976
    %v978 = vsub.f32 1.0, %v977
    %v979 = vmul.f32 %v976, %v978
    %v980 = vadd.f32 %v976, %v979
    %vm981 = vweird.f32 %v975
    %vm982 = vweird.f32 %v976
    %vm983 = vmor %vm981, %vm982
    %v984 = vsel %vm983, %v976, %v980
    %v985 = vand.u32 2147483647, %v975
    %vm986 = vcmp.eq.f32.partialorder %v985, 8.507059e+37
    %v987 = vand.u32 %v975, 2147483648
    %v988 = vor.u32 1.1754944e-38, %v987
    %v989 = vsel %vm986, %v988, %v984
    %v990 = vmul.f32 1.0, %v989
    %v991 = vtanh.pop %v951
    %v992 = vxor.u32 %v952, 2147483648
    %v993 = vmul.f32 %v992, 1.442695
    %v994 = vpow.pop %v993
    %v995 = vadd.f32 %v994, 1.0
    %v996 = vrcp.pop %v995
    %v997 = vmul.f32 %v995, %v996
    %v998 = vsub.f32 1.0, %v997
    %v999 = vmul.f32 %v996, %v998
    %v1000 = vadd.f32 %v996, %v999
    %vm1001 = vweird.f32 %v995
    %vm1002 = vweird.f32 %v996
    %vm1003 = vmor %vm1001, %vm1002
    %v1004 = vsel %vm1003, %v996, %v1000
    %v1005 = vand.u32 2147483647, %v995
    %vm1006 = vcmp.eq.f32.partialorder %v1005, 8.507059e+37
    %v1007 = vand.u32 %v995, 2147483648
    %v1008 = vor.u32 1.1754944e-38, %v1007
    %v1009 = vsel %vm1006, %v1008, %v1004
    %v1010 = vmul.f32 1.0, %v1009
    %v1011 = vmul.f32 %v990, %v794
    %v1012 = vmul.f32 %v971, %v991
    %v1013 = vadd.f32 %v1011, %v1012
    %v1014 = vtanh.pop %v1013
    %v1015 = vmul.f32 %v1010, %v1014
    %s1016 = scalar_lea.vmem %s7, %s795
    %1017 = vst [vmem:[%s1016] sm:$0xff] %v1015
  $region41: #{lstm_enc_forward.1} parent=0 // loop_footer
    %s792 = sadd.s32 1, %s788
  $region42: #{lstm_enc_forward.1} parent=0 // loop_footer_branch
    %787 = sbr.rel target = $region38
  $region43: #{lstm_enc_forward.1} parent=0 // loop_exit
    _
  %s1018 = scalar_lea.vmem %s8, 8
  %1019 = vst [vmem:[%s1018] sm:$0xff] %v793
  %s1020 = scalar_lea.vmem %s9, 8
  %1021 = vst [vmem:[%s1020] sm:$0xff] %v794
  // Predicated region
  $region44: #{lstm_enc_forward.1} parent=0 // pred_check
    _
  $region45: #{lstm_enc_forward.1} parent=0 // pred_check_branch
    %1023 = sbr.rel (0) target = $region47
  $region46: #{lstm_enc_forward.1} parent=0 // pred_region
    _
  $region47: #{lstm_enc_forward.1} parent=0 // pred_fallthru
    _
  // Predicated region
  $region48: #{lstm_enc_forward.1} parent=0 // pred_check
    _
  $region49: #{lstm_enc_forward.1} parent=0 // pred_check_branch
    %1025 = sbr.rel (0) target = $region51
  $region50: #{lstm_enc_forward.1} parent=0 // pred_region
    _
  $region51: #{lstm_enc_forward.1} parent=0 // pred_fallthru
    _
  // Predicated region
  $region52: #{lstm_enc_forward.1} parent=0 // pred_check
    _
  $region53: #{lstm_enc_forward.1} parent=0 // pred_check_branch
    %1027 = sbr.rel (0) target = $region55
  $region54: #{lstm_enc_forward.1} parent=0 // pred_region
    _
  $region55: #{lstm_enc_forward.1} parent=0 // pred_fallthru
    _
  // Predicated region
  $region56: #{lstm_enc_forward.1} parent=0 // pred_check
    _
  $region57: #{lstm_enc_forward.1} parent=0 // pred_check_branch
    %1029 = sbr.rel (0) target = $region59
  $region58: #{lstm_enc_forward.1} parent=0 // pred_region
    _
  $region59: #{lstm_enc_forward.1} parent=0 // pred_fallthru
    _
  // Predicated region
  $region60: #{lstm_enc_forward.1} parent=0 // pred_check
    _
  $region61: #{lstm_enc_forward.1} parent=0 // pred_check_branch
    %1031 = sbr.rel (0) target = $region63
  $region62: #{lstm_enc_forward.1} parent=0 // pred_region
    _
  $region63: #{lstm_enc_forward.1} parent=0 // pred_fallthru
    _
  // Predicated region
  $region64: #{lstm_enc_forward.1} parent=0 // pred_check
    _
  $region65: #{lstm_enc_forward.1} parent=0 // pred_check_branch
    %1033 = sbr.rel (0) target = $region67
  $region66: #{lstm_enc_forward.1} parent=0 // pred_region
    _
  $region67: #{lstm_enc_forward.1} parent=0 // pred_fallthru
    _

</llo_original>
